<compile_context>
chip_gen: v5e
topology: v5e:2x2
jax: 0.10.0
libtpu: 0.0.40
codegen_flags: <defaults>
</compile_context>

<pallas_src>
import jax
import jax.numpy as jnp
from jax.experimental import pallas as pl
from jax.experimental.pallas import tpu as pltpu


def _round_up(x, m):
    return (x + m - 1) // m * m


def _lane_padded_bytes(shape, itemsize):
    s = list(shape)
    s[-1] = _round_up(s[-1], 128)
    if len(s) >= 2:
        s[-2] = _round_up(s[-2], 8)
    n = 1
    for d in s:
        n *= d
    return n * itemsize


def _pick_batch_tile(B, N, target_rows=256):
    """Largest divisor TB of B with TB*N <= target_rows (fills the contraction
    depth of the block-diagonal propagation; 256 matches the v6e/v7x MXU and
    is a harmless over-ask on v5e)."""
    best = 1
    for tb in range(1, B + 1):
        if B % tb == 0 and tb * N <= target_rows:
            best = tb
    return best


def _fused_vmem_bytes(B, N, D_in, D_out, Cp, k, TB):
    TBN = TB * N
    per = 0
    per += 2 * _lane_padded_bytes((TB, N, D_in), 4)    # X blocks (dbl-buffered)
    per += 2 * _lane_padded_bytes((TB, N, N), 4)       # A blocks
    per += 2 * _lane_padded_bytes((TB, N, D_out), 4)   # out blocks
    per += 2 * _lane_padded_bytes((k, D_in, Cp), 2)    # W (bf16)
    per += 4 * _lane_padded_bytes((1, Cp), 4)          # gamma / beta
    per += _lane_padded_bytes((B, N, Cp), 4)           # VMEM-resident GCN out
    per += _lane_padded_bytes((TBN, TBN), 4)           # block-diagonal A
    per += 4 * _lane_padded_bytes((1, Cp), 4)          # stats / scale / shift
    return per


def _make_fused_kernel(k, eps, count, neg_slope=0.01):
    def kernel(x_ref, a_ref, w_ref, g_ref, b_ref, o_ref,
               y_scr, abd_scr, ssum_scr, ssq_scr, scale_scr, shift_scr):
        # x_ref : (TB, N, D_in) f32    a_ref : (TB, N, N) f32
        # w_ref : (k, D_in, Cp) bf16   g_ref / b_ref : (1, Cp) f32
        # o_ref : (TB, N, D_out) f32
        # y_scr : (B, N, Cp) f32 (persistent)   abd_scr : (TB*N, TB*N) f32
        p = pl.program_id(0)      # 0 = GCN + partial stats, 1 = BN + lrelu
        t = pl.program_id(1)      # batch tile
        TB, N, D_in = x_ref.shape
        Cp = y_scr.shape[-1]
        D_out = o_ref.shape[-1]
        TBN = TB * N
        row0 = pl.multiple_of(t * TB, TB)

        @pl.when(p == 0)
        def _gcn_phase():
            @pl.when(t == 0)
            def _init():
                ssum_scr[...] = jnp.zeros_like(ssum_scr)
                ssq_scr[...] = jnp.zeros_like(ssq_scr)
                # Off-diagonal zeros are written once; the diagonal blocks are
                # overwritten every step below.
                abd_scr[...] = jnp.zeros_like(abd_scr)

            # bf16 MXU operands (cast in-kernel: single f32 HBM read, no
            # separate cast pass), f32 accumulation on the MXU.
            x2 = x_ref[...].reshape(TBN, D_in).astype(jnp.bfloat16)

            # Block-diagonal adjacency: one (TBN,TBN)@(TBN,Cp) matmul per hop
            # instead of TB tiny (N,N)@(N,Cp) matmuls.
            for b in range(TB):                            # static unroll
                abd_scr[b * N:(b + 1) * N, b * N:(b + 1) * N] = a_ref[b]
            a_bd = abd_scr[...].astype(jnp.bfloat16)

            # Horner over hops:
            #   y = A (X W_0 + A (X W_1 + ... + A (X W_{k-1}) ...))
            #     = sum_{kk} A^{kk+1} X W_kk           (module's 'sum' field)
            # k == 1 (the PatchMTSC case) is a single propagate, fully in
            # registers -- no scratch round-trips.
            s = jnp.dot(x2, w_ref[k - 1], preferred_element_type=jnp.float32)
            for kk in range(k - 2, -1, -1):                # empty for k == 1
                s = (jnp.dot(x2, w_ref[kk],
                             preferred_element_type=jnp.float32)
                     + jnp.dot(a_bd, s.astype(jnp.bfloat16),
                               preferred_element_type=jnp.float32))
            y = jnp.dot(a_bd, s.astype(jnp.bfloat16),
                        preferred_element_type=jnp.float32)   # (TBN, Cp) f32

            y_scr[pl.ds(row0, TB), :, :] = y.reshape(TB, N, Cp)
            # Bias-free partial statistics: the Linear biases only shift the
            # per-channel mean and cancel exactly under training-mode BN, so
            # leaving them out keeps E[y^2] - E[y]^2 well conditioned.
            ssum_scr[...] += jnp.sum(y, axis=0, keepdims=True)
            ssq_scr[...] += jnp.sum(y * y, axis=0, keepdims=True)

        @pl.when(p == 1)
        def _bn_phase():
            @pl.when(t == 0)
            def _finalize_stats():
                inv_n = 1.0 / count
                mean = ssum_scr[...] * inv_n
                var = jnp.maximum(ssq_scr[...] * inv_n - mean * mean, 0.0)
                inv_std = jax.lax.rsqrt(var + eps)
                scale = g_ref[...] * inv_std
                scale_scr[...] = scale
                shift_scr[...] = b_ref[...] - mean * scale

            yt = y_scr[pl.ds(row0, TB), :, :]                  # (TB, N, Cp)
            out = yt * scale_scr[...] + shift_scr[...]
            out = jnp.where(out >= 0.0, out, neg_slope * out)
            o_ref[...] = out[:, :, :D_out]      # channel padding sliced here

    return kernel


def mpnn_mk_v2_forward(X, A, W, bias, bn_gamma, bn_beta, *, eps=1e-5,
                       batch_tile=None):
    """Fused MPNN_mk_v2 forward: leaky_relu(BN1d(sum_k (A^k X) W_k + b_k)).

    X:(B,N,D_in) f32, A:(B,N,N) f32, W:(k,D_in,D_out) pre-transposed Linear
    weights, bias:(k,D_out), bn_gamma/bn_beta:(D_out,).  Training-mode BN
    (batch statistics, biased variance), matching the PyTorch module's
    default forward."""
    B, N, D_in = X.shape
    k, D_in_w, D_out = W.shape
    assert D_in_w == D_in
    assert N % 8 == 0, "node axis must be a multiple of 8 (pad outside)"

    Cp = _round_up(D_out, 128)        # lane-dense channel dim for MXU / VMEM
    pad_c = Cp - D_out
    Wp = jnp.pad(W, ((0, 0), (0, 0), (0, pad_c))).astype(jnp.bfloat16)
    gamma_p = jnp.pad(bn_gamma.reshape(1, D_out).astype(jnp.float32),
                      ((0, 0), (0, pad_c)))
    beta_p = jnp.pad(bn_beta.reshape(1, D_out).astype(jnp.float32),
                     ((0, 0), (0, pad_c)))
    # The k Linear biases add a per-channel constant that training-mode
    # BatchNorm removes exactly (mean subtraction), so they are folded away;
    # the reference checks in __main__ include them explicitly.
    del bias

    if batch_tile is None:
        batch_tile = _pick_batch_tile(B, N)
    assert B % batch_tile == 0
    TB = batch_tile
    nt = B // TB
    TBN = TB * N

    # Generation-aware VMEM policy (v7x: 64 MiB / TC, v5e/v6e: 128 MiB).
    try:
        vmem_cap = int(pltpu.get_tpu_info().vmem_capacity_bytes)
    except Exception:
        vmem_cap = 64 * 1024 * 1024
    vmem_limit = min(int(vmem_cap * 0.5), 96 * 1024 * 1024)
    need = _fused_vmem_bytes(B, N, D_in, D_out, Cp, k, TB)
    if need > int(0.8 * vmem_limit):
        raise ValueError(
            f"fused MPNN kernel needs ~{need} bytes of VMEM (budget "
            f"{int(0.8 * vmem_limit)}); reduce batch_tile / batch size")

    kernel = _make_fused_kernel(k=k, eps=float(eps), count=float(B * N))

    grid_spec = pltpu.PrefetchScalarGridSpec(
        num_scalar_prefetch=0,
        grid=(2, nt),                            # (phase, batch tile)
        in_specs=[
            # Phase 1 maps every input to the block already resident in VMEM
            # so no input DMA is issued while normalizing.
            pl.BlockSpec((TB, N, D_in),
                         lambda p, t: (t * (1 - p) + (nt - 1) * p, 0, 0)),
            pl.BlockSpec((TB, N, N),
                         lambda p, t: (t * (1 - p) + (nt - 1) * p, 0, 0)),
            pl.BlockSpec((k, D_in, Cp), lambda p, t: (0, 0, 0)),
            pl.BlockSpec((1, Cp), lambda p, t: (0, 0)),
            pl.BlockSpec((1, Cp), lambda p, t: (0, 0)),
        ],
        # Written only in phase 1; during phase 0 the index stays pinned to
        # block 0 so nothing is flushed early.
        out_specs=pl.BlockSpec((TB, N, D_out), lambda p, t: (t * p, 0, 0)),
        scratch_shapes=[
            pltpu.VMEM((B, N, Cp), jnp.float32),     # VMEM-resident GCN output
            pltpu.VMEM((TBN, TBN), jnp.float32),     # block-diagonal adjacency
            pltpu.VMEM((1, Cp), jnp.float32),        # sum(y)
            pltpu.VMEM((1, Cp), jnp.float32),        # sum(y*y)
            pltpu.VMEM((1, Cp), jnp.float32),        # BN scale
            pltpu.VMEM((1, Cp), jnp.float32),        # BN shift
        ],
    )
    return pl.pallas_call(
        kernel,
        out_shape=jax.ShapeDtypeStruct((B, N, D_out), jnp.float32),
        grid_spec=grid_spec,
        compiler_params=pltpu.CompilerParams(
            # Both axes carry state (shared BN stats / resident Y) -> sequential.
            dimension_semantics=("arbitrary", "arbitrary"),
            vmem_limit_bytes=vmem_limit,
        ),
    )(X.astype(jnp.float32), A.astype(jnp.float32), Wp, gamma_p, beta_p)


# ----------------------------------------------------------------------------
# Pure-JAX references
# ----------------------------------------------------------------------------
def _bf(v):
    return v.astype(jnp.bfloat16).astype(jnp.float32)


def mpnn_mk_v2_reference_mirrored(X, A, W, bias, gamma, beta, eps=1e-5):
    """Same math as the kernel (Horner form of the module's summed fields),
    with the kernel's bf16 MXU-operand rounding mirrored -> tight check."""
    k = W.shape[0]
    Xb, Ab, Wb = _bf(X), _bf(A), _bf(W)
    s = jnp.einsum('bnd,dc->bnc', Xb, Wb[k - 1])
    for kk in range(k - 2, -1, -1):
        s = (jnp.einsum('bnd,dc->bnc', Xb, Wb[kk])
             + jnp.einsum('bij,bjc->bic', Ab, _bf(s)))
    y = jnp.einsum('bij,bjc->bic', Ab, _bf(s))
    y = y + jnp.sum(bias, axis=0)                 # constant shift, cancels in BN
    mean = jnp.mean(y, axis=(0, 1), keepdims=True)
    var = jnp.mean(jnp.square(y - mean), axis=(0, 1), keepdims=True)
    out = (y - mean) * jax.lax.rsqrt(var + eps) * gamma + beta
    return jnp.where(out >= 0.0, out, 0.01 * out)


def mpnn_mk_v2_reference_module(X, A, W, bias, gamma, beta, eps=1e-5):
    """Literal transcription of MPNN_mk_v2.forward ('sum' field) + BatchNorm1d
    (training mode, biased variance) + leaky_relu.  Only the input operands
    are rounded to bf16 (what the kernel feeds the MXU); intermediates stay
    f32 -> looser sanity check of the Horner / bias-folding refactoring."""
    k = W.shape[0]
    Xb, Ab, Wb = _bf(X), _bf(A), _bf(W)
    acc = jnp.zeros(X.shape[:2] + (W.shape[-1],), jnp.float32)
    A_pow = Ab
    for kk in range(k):
        if kk > 0:
            A_pow = jnp.einsum('bij,bjk->bik', A_pow, Ab)
        acc = acc + jnp.einsum('bij,bjd->bid', A_pow, Xb) @ Wb[kk] + bias[kk]
    mean = jnp.mean(acc, axis=(0, 1), keepdims=True)
    var = jnp.mean(jnp.square(acc - mean), axis=(0, 1), keepdims=True)
    out = (acc - mean) * jax.lax.rsqrt(var + eps) * gamma + beta
    return jnp.where(out >= 0.0, out, 0.01 * out)


if __name__ == "__main__":
    # Shapes implied by PatchMTSC's use of the block:
    #   B = batch * n_vars graphs, N = patch_len nodes, D = d_model_patch.
    B, N, D = 8, 8, 32

    key = jax.random.PRNGKey(0)
    kx, ka, kg, kb = jax.random.split(key, 4)

    X = jax.random.normal(kx, (B, N, D), dtype=jnp.float32)
    # Dot_Graph_Construction-style adjacency (row softmax + identity), times a
    # decaying mask standing in for Mask_Matrix (pre_relation).
    logits = jax.random.normal(ka, (B, N, N), dtype=jnp.float32)
    A = jax.nn.softmax(logits, axis=-1) + jnp.eye(N, dtype=jnp.float32)[None]
    dist = jnp.abs(jnp.arange(N)[:, None] - jnp.arange(N)[None, :])
    A = A * (0.7 ** dist.astype(jnp.float32))[None]

    # Non-trivial BatchNorm affine params (PyTorch default init is 1 / 0).
    bn_gamma = 1.0 + 0.1 * jax.random.normal(kg, (D,), dtype=jnp.float32)
    bn_beta = 0.1 * jax.random.normal(kb, (D,), dtype=jnp.float32)

    # k = 1 is the PatchMTSC configuration; k = 2 with an explicit batch_tile
    # exercises the hop recursion and the multi-tile two-phase pipeline.
    for k_hops, tile in ((1, None), (2, 2)):
        kw, kbias = jax.random.split(jax.random.fold_in(key, k_hops))
        W = 0.1 * jax.random.normal(kw, (k_hops, D, D), dtype=jnp.float32)
        bias = 0.1 * jax.random.normal(kbias, (k_hops, D), dtype=jnp.float32)

        out = mpnn_mk_v2_forward(X, A, W, bias, bn_gamma, bn_beta,
                                 batch_tile=tile)
        out = jax.block_until_ready(out)
        assert out.shape == (B, N, D)
        assert bool(jnp.all(jnp.isfinite(out)))

        ref_tight = mpnn_mk_v2_reference_mirrored(X, A, W, bias,
                                                  bn_gamma, bn_beta)
        err_tight = float(jnp.max(jnp.abs(out - ref_tight)))
        assert err_tight < 2e-2, (
            f"k={k_hops}: mismatch vs mirrored reference ({err_tight})")

        # Gap vs the all-f32 module-order reference is bf16 intermediate
        # rounding amplified by the 1/std BN normalization.
        ref_mod = mpnn_mk_v2_reference_module(X, A, W, bias,
                                              bn_gamma, bn_beta)
        err_mod = float(jnp.max(jnp.abs(out - ref_mod)))
        assert err_mod < 8e-2, (
            f"k={k_hops}: mismatch vs module reference ({err_mod})")

    print("KERNEL_OK")
</pallas_src>

<mosaic_0001>
module attributes {stable_mosaic.version = 11 : i64} {
  func.func @kernel(%arg0: i32, %arg1: i32, %arg2: memref<8x8x32xf32, #tpu.memory_space<vmem>>, %arg3: memref<8x8x8xf32, #tpu.memory_space<vmem>>, %arg4: memref<1x32x128xbf16, #tpu.memory_space<vmem>>, %arg5: memref<1x128xf32, #tpu.memory_space<vmem>>, %arg6: memref<1x128xf32, #tpu.memory_space<vmem>>, %arg7: memref<8x8x32xf32, #tpu.memory_space<vmem>>, %arg8: memref<8x8x128xf32, #tpu.memory_space<vmem>>, %arg9: memref<64x64xf32, #tpu.memory_space<vmem>>, %arg10: memref<1x128xf32, #tpu.memory_space<vmem>>, %arg11: memref<1x128xf32, #tpu.memory_space<vmem>>, %arg12: memref<1x128xf32, #tpu.memory_space<vmem>>, %arg13: memref<1x128xf32, #tpu.memory_space<vmem>>) attributes {dimension_semantics = [#tpu.dimension_semantics<arbitrary>, #tpu.dimension_semantics<arbitrary>], iteration_bounds = array<i64: 2, 1>, scalar_prefetch = 0 : i64, scratch_operands = 6 : i64, tpu.core_type = #tpu.core_type<tc>, window_params = [{transform_indices = @transform_0, window_bounds = array<i64: 8, 8, 32>}, {transform_indices = @transform_1, window_bounds = array<i64: 8, 8, 8>}, {pipeline_mode = #tpu.pipeline_mode<synchronous>, transform_indices = @transform_2, window_bounds = array<i64: 1, 32, 128>}, {pipeline_mode = #tpu.pipeline_mode<synchronous>, transform_indices = @transform_3, window_bounds = array<i64: 1, 128>}, {pipeline_mode = #tpu.pipeline_mode<synchronous>, transform_indices = @transform_4, window_bounds = array<i64: 1, 128>}, {transform_indices = @transform_5, window_bounds = array<i64: 8, 8, 32>}]} {
    %c8_i32 = arith.constant 8 : i32
    %0 = arith.muli %arg1, %c8_i32 : i32
    %1 = tpu.assume_multiple %0, 8 : i32
    %c0_i32 = arith.constant 0 : i32
    %2 = arith.cmpi eq, %arg0, %c0_i32 : i32
    %3 = arith.extui %2 : i1 to i32
    %c0_i32_0 = arith.constant 0 : i32
    %4 = arith.cmpi ne, %3, %c0_i32_0 : i32
    scf.if %4 {
      %c0_i32_2 = arith.constant 0 : i32
      %8 = arith.cmpi eq, %arg1, %c0_i32_2 : i32
      %9 = arith.extui %8 : i1 to i32
      %c0_i32_3 = arith.constant 0 : i32
      %10 = arith.cmpi ne, %9, %c0_i32_3 : i32
      scf.if %10 {
        %cst_50 = arith.constant 0.000000e+00 : f32
        %59 = vector.broadcast %cst_50 : f32 to vector<1x128xf32>
        %c0_51 = arith.constant 0 : index
        %c0_52 = arith.constant 0 : index
        %60 = vector.load %arg10[%c0_51, %c0_52] : memref<1x128xf32, #tpu.memory_space<vmem>>, vector<1x128xf32>
        tpu.vector_store %arg10[%c0_51, %c0_52], %59 {strides = array<i32>} : memref<1x128xf32, #tpu.memory_space<vmem>>, vector<1x128xf32>,
        %cst_53 = arith.constant 0.000000e+00 : f32
        %61 = vector.broadcast %cst_53 : f32 to vector<1x128xf32>
        %c0_54 = arith.constant 0 : index
        %c0_55 = arith.constant 0 : index
        %62 = vector.load %arg11[%c0_54, %c0_55] : memref<1x128xf32, #tpu.memory_space<vmem>>, vector<1x128xf32>
        tpu.vector_store %arg11[%c0_54, %c0_55], %61 {strides = array<i32>} : memref<1x128xf32, #tpu.memory_space<vmem>>, vector<1x128xf32>,
        %cst_56 = arith.constant 0.000000e+00 : f32
        %63 = vector.broadcast %cst_56 : f32 to vector<64x64xf32>
        %c0_57 = arith.constant 0 : index
        %c0_58 = arith.constant 0 : index
        %64 = vector.load %arg9[%c0_57, %c0_58] : memref<64x64xf32, #tpu.memory_space<vmem>>, vector<64x64xf32>
        tpu.vector_store %arg9[%c0_57, %c0_58], %63 {strides = array<i32>} : memref<64x64xf32, #tpu.memory_space<vmem>>, vector<64x64xf32>,
      } else {
      }
      %c0 = arith.constant 0 : index
      %c0_4 = arith.constant 0 : index
      %c0_5 = arith.constant 0 : index
      %11 = vector.load %arg2[%c0, %c0_4, %c0_5] : memref<8x8x32xf32, #tpu.memory_space<vmem>>, vector<8x8x32xf32>
      %12 = vector.shape_cast %11 : vector<8x8x32xf32> to vector<64x32xf32>
      %13 = arith.truncf %12 : vector<64x32xf32> to vector<64x32xbf16>
      %c0_6 = arith.constant 0 : index
      %c0_7 = arith.constant 0 : index
      %c0_8 = arith.constant 0 : index
      %14 = vector.load %arg3[%c0_6, %c0_7, %c0_8] : memref<8x8x8xf32, #tpu.memory_space<vmem>>, vector<1x8x8xf32>
      %15 = vector.shape_cast %14 : vector<1x8x8xf32> to vector<8x8xf32>
      %c0_9 = arith.constant 0 : index
      %c0_10 = arith.constant 0 : index
      %16 = vector.load %arg9[%c0_9, %c0_10] : memref<64x64xf32, #tpu.memory_space<vmem>>, vector<8x8xf32>
      tpu.vector_store %arg9[%c0_9, %c0_10], %15 {strides = array<i32>} : memref<64x64xf32, #tpu.memory_space<vmem>>, vector<8x8xf32>,
      %c1 = arith.constant 1 : index
      %c0_11 = arith.constant 0 : index
      %c0_12 = arith.constant 0 : index
      %17 = vector.load %arg3[%c1, %c0_11, %c0_12] : memref<8x8x8xf32, #tpu.memory_space<vmem>>, vector<1x8x8xf32>
      %18 = vector.shape_cast %17 : vector<1x8x8xf32> to vector<8x8xf32>
      %c8 = arith.constant 8 : index
      %c8_13 = arith.constant 8 : index
      %19 = vector.load %arg9[%c8, %c8_13] : memref<64x64xf32, #tpu.memory_space<vmem>>, vector<8x8xf32>
      tpu.vector_store %arg9[%c8, %c8_13], %18 {strides = array<i32>} : memref<64x64xf32, #tpu.memory_space<vmem>>, vector<8x8xf32>,
      %c2 = arith.constant 2 : index
      %c0_14 = arith.constant 0 : index
      %c0_15 = arith.constant 0 : index
      %20 = vector.load %arg3[%c2, %c0_14, %c0_15] : memref<8x8x8xf32, #tpu.memory_space<vmem>>, vector<1x8x8xf32>
      %21 = vector.shape_cast %20 : vector<1x8x8xf32> to vector<8x8xf32>
      %c16 = arith.constant 16 : index
      %c16_16 = arith.constant 16 : index
      %22 = vector.load %arg9[%c16, %c16_16] : memref<64x64xf32, #tpu.memory_space<vmem>>, vector<8x8xf32>
      tpu.vector_store %arg9[%c16, %c16_16], %21 {strides = array<i32>} : memref<64x64xf32, #tpu.memory_space<vmem>>, vector<8x8xf32>,
      %c3 = arith.constant 3 : index
      %c0_17 = arith.constant 0 : index
      %c0_18 = arith.constant 0 : index
      %23 = vector.load %arg3[%c3, %c0_17, %c0_18] : memref<8x8x8xf32, #tpu.memory_space<vmem>>, vector<1x8x8xf32>
      %24 = vector.shape_cast %23 : vector<1x8x8xf32> to vector<8x8xf32>
      %c24 = arith.constant 24 : index
      %c24_19 = arith.constant 24 : index
      %25 = vector.load %arg9[%c24, %c24_19] : memref<64x64xf32, #tpu.memory_space<vmem>>, vector<8x8xf32>
      tpu.vector_store %arg9[%c24, %c24_19], %24 {strides = array<i32>} : memref<64x64xf32, #tpu.memory_space<vmem>>, vector<8x8xf32>,
      %c4 = arith.constant 4 : index
      %c0_20 = arith.constant 0 : index
      %c0_21 = arith.constant 0 : index
      %26 = vector.load %arg3[%c4, %c0_20, %c0_21] : memref<8x8x8xf32, #tpu.memory_space<vmem>>, vector<1x8x8xf32>
      %27 = vector.shape_cast %26 : vector<1x8x8xf32> to vector<8x8xf32>
      %c32 = arith.constant 32 : index
      %c32_22 = arith.constant 32 : index
      %28 = vector.load %arg9[%c32, %c32_22] : memref<64x64xf32, #tpu.memory_space<vmem>>, vector<8x8xf32>
      tpu.vector_store %arg9[%c32, %c32_22], %27 {strides = array<i32>} : memref<64x64xf32, #tpu.memory_space<vmem>>, vector<8x8xf32>,
      %c5 = arith.constant 5 : index
      %c0_23 = arith.constant 0 : index
      %c0_24 = arith.constant 0 : index
      %29 = vector.load %arg3[%c5, %c0_23, %c0_24] : memref<8x8x8xf32, #tpu.memory_space<vmem>>, vector<1x8x8xf32>
      %30 = vector.shape_cast %29 : vector<1x8x8xf32> to vector<8x8xf32>
      %c40 = arith.constant 40 : index
      %c40_25 = arith.constant 40 : index
      %31 = vector.load %arg9[%c40, %c40_25] : memref<64x64xf32, #tpu.memory_space<vmem>>, vector<8x8xf32>
      tpu.vector_store %arg9[%c40, %c40_25], %30 {strides = array<i32>} : memref<64x64xf32, #tpu.memory_space<vmem>>, vector<8x8xf32>,
      %c6 = arith.constant 6 : index
      %c0_26 = arith.constant 0 : index
      %c0_27 = arith.constant 0 : index
      %32 = vector.load %arg3[%c6, %c0_26, %c0_27] : memref<8x8x8xf32, #tpu.memory_space<vmem>>, vector<1x8x8xf32>
      %33 = vector.shape_cast %32 : vector<1x8x8xf32> to vector<8x8xf32>
      %c48 = arith.constant 48 : index
      %c48_28 = arith.constant 48 : index
      %34 = vector.load %arg9[%c48, %c48_28] : memref<64x64xf32, #tpu.memory_space<vmem>>, vector<8x8xf32>
      tpu.vector_store %arg9[%c48, %c48_28], %33 {strides = array<i32>} : memref<64x64xf32, #tpu.memory_space<vmem>>, vector<8x8xf32>,
      %c7 = arith.constant 7 : index
      %c0_29 = arith.constant 0 : index
      %c0_30 = arith.constant 0 : index
      %35 = vector.load %arg3[%c7, %c0_29, %c0_30] : memref<8x8x8xf32, #tpu.memory_space<vmem>>, vector<1x8x8xf32>
      %36 = vector.shape_cast %35 : vector<1x8x8xf32> to vector<8x8xf32>
      %c56 = arith.constant 56 : index
      %c56_31 = arith.constant 56 : index
      %37 = vector.load %arg9[%c56, %c56_31] : memref<64x64xf32, #tpu.memory_space<vmem>>, vector<8x8xf32>
      tpu.vector_store %arg9[%c56, %c56_31], %36 {strides = array<i32>} : memref<64x64xf32, #tpu.memory_space<vmem>>, vector<8x8xf32>,
      %c0_32 = arith.constant 0 : index
      %c0_33 = arith.constant 0 : index
      %38 = vector.load %arg9[%c0_32, %c0_33] : memref<64x64xf32, #tpu.memory_space<vmem>>, vector<64x64xf32>
      %39 = arith.truncf %38 : vector<64x64xf32> to vector<64x64xbf16>
      %c0_34 = arith.constant 0 : index
      %c0_35 = arith.constant 0 : index
      %c0_36 = arith.constant 0 : index
      %40 = vector.load %arg4[%c0_34, %c0_35, %c0_36] : memref<1x32x128xbf16, #tpu.memory_space<vmem>>, vector<1x32x128xbf16>
      %41 = vector.shape_cast %40 : vector<1x32x128xbf16> to vector<32x128xbf16>
      %cst = arith.constant dense<0.000000e+00> : vector<64x128xf32>
      %42 = tpu.matmul %13, %41, %cst {dimension_numbers = #tpu.dot_dimension_numbers<[1], [0], [0], [1], [0, 0, 1, 1], [], []>} : vector<64x32xbf16>, vector<32x128xbf16>, vector<64x128xf32> -> vector<64x128xf32>
      %43 = arith.truncf %42 : vector<64x128xf32> to vector<64x128xbf16>
      %cst_37 = arith.constant dense<0.000000e+00> : vector<64x128xf32>
      %44 = tpu.matmul %39, %43, %cst_37 {dimension_numbers = #tpu.dot_dimension_numbers<[1], [0], [0], [1], [0, 0, 1, 1], [], []>} : vector<64x64xbf16>, vector<64x128xbf16>, vector<64x128xf32> -> vector<64x128xf32>
      %45 = vector.shape_cast %44 : vector<64x128xf32> to vector<8x8x128xf32>
      %46 = arith.index_cast %1 : i32 to index
      %c0_38 = arith.constant 0 : index
      %c0_39 = arith.constant 0 : index
      %47 = vector.load %arg8[%46, %c0_38, %c0_39] : memref<8x8x128xf32, #tpu.memory_space<vmem>>, vector<8x8x128xf32>
      tpu.vector_store %arg8[%46, %c0_38, %c0_39], %45 {strides = array<i32>} : memref<8x8x128xf32, #tpu.memory_space<vmem>>, vector<8x8x128xf32>,
      %c0_40 = arith.constant 0 : index
      %c0_41 = arith.constant 0 : index
      %48 = vector.load %arg10[%c0_40, %c0_41] : memref<1x128xf32, #tpu.memory_space<vmem>>, vector<1x128xf32>
      %cst_42 = arith.constant dense<0.000000e+00> : vector<128xf32>
      %49 = vector.multi_reduction <add>, %44, %cst_42 [0] : vector<64x128xf32> to vector<128xf32>
      %50 = vector.shape_cast %49 : vector<128xf32> to vector<1x128xf32>
      %51 = arith.addf %48, %50 : vector<1x128xf32>
      %c0_43 = arith.constant 0 : index
      %c0_44 = arith.constant 0 : index
      %52 = vector.load %arg10[%c0_43, %c0_44] : memref<1x128xf32, #tpu.memory_space<vmem>>, vector<1x128xf32>
      tpu.vector_store %arg10[%c0_43, %c0_44], %51 {strides = array<i32>} : memref<1x128xf32, #tpu.memory_space<vmem>>, vector<1x128xf32>,
      %c0_45 = arith.constant 0 : index
      %c0_46 = arith.constant 0 : index
      %53 = vector.load %arg11[%c0_45, %c0_46] : memref<1x128xf32, #tpu.memory_space<vmem>>, vector<1x128xf32>
      %54 = arith.mulf %44, %44 : vector<64x128xf32>
      %cst_47 = arith.constant dense<0.000000e+00> : vector<128xf32>
      %55 = vector.multi_reduction <add>, %54, %cst_47 [0] : vector<64x128xf32> to vector<128xf32>
      %56 = vector.shape_cast %55 : vector<128xf32> to vector<1x128xf32>
      %57 = arith.addf %53, %56 : vector<1x128xf32>
      %c0_48 = arith.constant 0 : index
      %c0_49 = arith.constant 0 : index
      %58 = vector.load %arg11[%c0_48, %c0_49] : memref<1x128xf32, #tpu.memory_space<vmem>>, vector<1x128xf32>
      tpu.vector_store %arg11[%c0_48, %c0_49], %57 {strides = array<i32>} : memref<1x128xf32, #tpu.memory_space<vmem>>, vector<1x128xf32>,
    } else {
    }
    %c1_i32 = arith.constant 1 : i32
    %5 = arith.cmpi eq, %arg0, %c1_i32 : i32
    %6 = arith.extui %5 : i1 to i32
    %c0_i32_1 = arith.constant 0 : i32
    %7 = arith.cmpi ne, %6, %c0_i32_1 : i32
    scf.if %7 {
      %c0_i32_2 = arith.constant 0 : i32
      %8 = arith.cmpi eq, %arg1, %c0_i32_2 : i32
      %9 = arith.extui %8 : i1 to i32
      %c0_i32_3 = arith.constant 0 : i32
      %10 = arith.cmpi ne, %9, %c0_i32_3 : i32
      scf.if %10 {
        %c0_13 = arith.constant 0 : index
        %c0_14 = arith.constant 0 : index
        %28 = vector.load %arg10[%c0_13, %c0_14] : memref<1x128xf32, #tpu.memory_space<vmem>>, vector<1x128xf32>
        %cst_15 = arith.constant 1.562500e-02 : f32
        %29 = vector.broadcast %cst_15 : f32 to vector<1x128xf32>
        %30 = arith.mulf %28, %29 : vector<1x128xf32>
        %c0_16 = arith.constant 0 : index
        %c0_17 = arith.constant 0 : index
        %31 = vector.load %arg11[%c0_16, %c0_17] : memref<1x128xf32, #tpu.memory_space<vmem>>, vector<1x128xf32>
        %cst_18 = arith.constant 1.562500e-02 : f32
        %32 = vector.broadcast %cst_18 : f32 to vector<1x128xf32>
        %33 = arith.mulf %31, %32 : vector<1x128xf32>
        %34 = arith.mulf %30, %30 : vector<1x128xf32>
        %35 = arith.subf %33, %34 : vector<1x128xf32>
        %cst_19 = arith.constant 0.000000e+00 : f32
        %36 = vector.broadcast %cst_19 : f32 to vector<1x128xf32>
        %37 = arith.maximumf %35, %36 : vector<1x128xf32>
        %cst_20 = arith.constant 9.99999974E-6 : f32
        %38 = vector.broadcast %cst_20 : f32 to vector<1x128xf32>
        %39 = arith.addf %37, %38 : vector<1x128xf32>
        %40 = math.rsqrt %39 : vector<1x128xf32>
        %c0_21 = arith.constant 0 : index
        %c0_22 = arith.constant 0 : index
        %41 = vector.load %arg5[%c0_21, %c0_22] : memref<1x128xf32, #tpu.memory_space<vmem>>, vector<1x128xf32>
        %42 = arith.mulf %41, %40 : vector<1x128xf32>
        %c0_23 = arith.constant 0 : index
        %c0_24 = arith.constant 0 : index
        %43 = vector.load %arg12[%c0_23, %c0_24] : memref<1x128xf32, #tpu.memory_space<vmem>>, vector<1x128xf32>
        tpu.vector_store %arg12[%c0_23, %c0_24], %42 {strides = array<i32>} : memref<1x128xf32, #tpu.memory_space<vmem>>, vector<1x128xf32>,
        %c0_25 = arith.constant 0 : index
        %c0_26 = arith.constant 0 : index
        %44 = vector.load %arg6[%c0_25, %c0_26] : memref<1x128xf32, #tpu.memory_space<vmem>>, vector<1x128xf32>
        %45 = arith.mulf %30, %42 : vector<1x128xf32>
        %46 = arith.subf %44, %45 : vector<1x128xf32>
        %c0_27 = arith.constant 0 : index
        %c0_28 = arith.constant 0 : index
        %47 = vector.load %arg13[%c0_27, %c0_28] : memref<1x128xf32, #tpu.memory_space<vmem>>, vector<1x128xf32>
        tpu.vector_store %arg13[%c0_27, %c0_28], %46 {strides = array<i32>} : memref<1x128xf32, #tpu.memory_space<vmem>>, vector<1x128xf32>,
      } else {
      }
      %11 = arith.index_cast %1 : i32 to index
      %c0 = arith.constant 0 : index
      %c0_4 = arith.constant 0 : index
      %12 = vector.load %arg8[%11, %c0, %c0_4] : memref<8x8x128xf32, #tpu.memory_space<vmem>>, vector<8x8x128xf32>
      %c0_5 = arith.constant 0 : index
      %c0_6 = arith.constant 0 : index
      %13 = vector.load %arg12[%c0_5, %c0_6] : memref<1x128xf32, #tpu.memory_space<vmem>>, vector<1x128xf32>
      %14 = vector.shape_cast %13 : vector<1x128xf32> to vector<1x1x128xf32>
      %15 = vector.broadcast %14 : vector<1x1x128xf32> to vector<8x8x128xf32>
      %16 = arith.mulf %12, %15 : vector<8x8x128xf32>
      %c0_7 = arith.constant 0 : index
      %c0_8 = arith.constant 0 : index
      %17 = vector.load %arg13[%c0_7, %c0_8] : memref<1x128xf32, #tpu.memory_space<vmem>>, vector<1x128xf32>
      %18 = vector.shape_cast %17 : vector<1x128xf32> to vector<1x1x128xf32>
      %19 = vector.broadcast %18 : vector<1x1x128xf32> to vector<8x8x128xf32>
      %20 = arith.addf %16, %19 : vector<8x8x128xf32>
      %cst = arith.constant 0.000000e+00 : f32
      %21 = vector.broadcast %cst : f32 to vector<8x8x128xf32>
      %22 = arith.cmpf oge, %20, %21 : vector<8x8x128xf32>
      %cst_9 = arith.constant 0.00999999977 : f32
      %23 = vector.broadcast %cst_9 : f32 to vector<8x8x128xf32>
      %24 = arith.mulf %23, %20 : vector<8x8x128xf32>
      %25 = arith.select %22, %20, %24 : vector<8x8x128xi1>, vector<8x8x128xf32>
      %26 = vector.extract_strided_slice %25 {offsets = [0, 0, 0], sizes = [8, 8, 32], strides = [1, 1, 1]} : vector<8x8x128xf32> to vector<8x8x32xf32>
      %c0_10 = arith.constant 0 : index
      %c0_11 = arith.constant 0 : index
      %c0_12 = arith.constant 0 : index
      %27 = vector.load %arg7[%c0_10, %c0_11, %c0_12] : memref<8x8x32xf32, #tpu.memory_space<vmem>>, vector<8x8x32xf32>
      tpu.vector_store %arg7[%c0_10, %c0_11, %c0_12], %26 {strides = array<i32>} : memref<8x8x32xf32, #tpu.memory_space<vmem>>, vector<8x8x32xf32>,
    } else {
    }
    return
  }
  func.func @transform_0(%arg0: i32, %arg1: i32) -> (i32, i32, i32) {
    %c1_i32 = arith.constant 1 : i32
    %0 = arith.subi %c1_i32, %arg0 : i32
    %1 = arith.muli %arg1, %0 : i32
    %c0_i32 = arith.constant 0 : i32
    %2 = arith.muli %c0_i32, %arg0 : i32
    %3 = arith.addi %1, %2 : i32
    %c0_i32_0 = arith.constant 0 : i32
    %c0_i32_1 = arith.constant 0 : i32
    %c0_i32_2 = arith.constant 0 : i32
    return %3, %c0_i32_0, %c0_i32_1 : i32, i32, i32
  }
  func.func @transform_1(%arg0: i32, %arg1: i32) -> (i32, i32, i32) {
    %c1_i32 = arith.constant 1 : i32
    %0 = arith.subi %c1_i32, %arg0 : i32
    %1 = arith.muli %arg1, %0 : i32
    %c0_i32 = arith.constant 0 : i32
    %2 = arith.muli %c0_i32, %arg0 : i32
    %3 = arith.addi %1, %2 : i32
    %c0_i32_0 = arith.constant 0 : i32
    %c0_i32_1 = arith.constant 0 : i32
    %c0_i32_2 = arith.constant 0 : i32
    return %3, %c0_i32_0, %c0_i32_1 : i32, i32, i32
  }
  func.func @transform_2(%arg0: i32, %arg1: i32) -> (i32, i32, i32) {
    %c0_i32 = arith.constant 0 : i32
    %c0_i32_0 = arith.constant 0 : i32
    %c0_i32_1 = arith.constant 0 : i32
    %c0_i32_2 = arith.constant 0 : i32
    return %c0_i32, %c0_i32_0, %c0_i32_1 : i32, i32, i32
  }
  func.func @transform_3(%arg0: i32, %arg1: i32) -> (i32, i32) {
    %c0_i32 = arith.constant 0 : i32
    %c0_i32_0 = arith.constant 0 : i32
    %c0_i32_1 = arith.constant 0 : i32
    return %c0_i32, %c0_i32_0 : i32, i32
  }
  func.func @transform_4(%arg0: i32, %arg1: i32) -> (i32, i32) {
    %c0_i32 = arith.constant 0 : i32
    %c0_i32_0 = arith.constant 0 : i32
    %c0_i32_1 = arith.constant 0 : i32
    return %c0_i32, %c0_i32_0 : i32, i32
  }
  func.func @transform_5(%arg0: i32, %arg1: i32) -> (i32, i32, i32) {
    %0 = arith.muli %arg1, %arg0 : i32
    %c0_i32 = arith.constant 0 : i32
    %c0_i32_0 = arith.constant 0 : i32
    %c0_i32_1 = arith.constant 0 : i32
    return %0, %c0_i32, %c0_i32_0 : i32, i32, i32
  }
}

</mosaic_0001>

<llo_original>
// kernel: tpu_custom_call.1
$region0: #{tpu_custom_call.1}
  #allocation0 [shape = 'u32[]', space=smem, size = 0x4, offset = 0x4, fixed_abs, tag = 'smem constant byte address 0x4 - core index']
  #allocation1 [shape = 'u32[72,128]{1,0:T(1,128)}', space=vmem, size = 0x9000, scoped, tag = 'internal scratch']
  #allocation2 [shape = 'f32[8,8,128]{2,1,0:T(8,128)}', space=vmem, size = 0x8000, scoped, tag = 'scratch operand']
  #allocation3 [shape = 'f32[64,64]{1,0:T(8,128)}', space=vmem, size = 0x8000, scoped, tag = 'scratch operand']
  #allocation4 [shape = 'f32[1,128]{1,0:T(1,128)}', space=vmem, size = 0x200, scoped, tag = 'scratch operand']
  #allocation5 [shape = 'f32[1,128]{1,0:T(1,128)}', space=vmem, size = 0x200, scoped, tag = 'scratch operand']
  #allocation6 [shape = 'f32[1,128]{1,0:T(1,128)}', space=vmem, size = 0x200, scoped, tag = 'scratch operand']
  #allocation7 [shape = 'f32[1,128]{1,0:T(1,128)}', space=vmem, size = 0x200, scoped, tag = 'scratch operand']
  %s0 = inlined_call_operand.hbm [shape: f32[8,8,32], index: 0, kind: input, shape index: {}]
  %s1 = inlined_call_operand.hbm [shape: f32[8,8,8], index: 1, kind: input, shape index: {}]
  %s2 = inlined_call_operand.hbm [shape: bf16[1,32,128], index: 2, kind: input, shape index: {}]
  %s3 = inlined_call_operand.vmem [shape: f32[1,128], index: 3, kind: input, shape index: {}]
  %s4 = inlined_call_operand.vmem [shape: f32[1,128], index: 4, kind: input, shape index: {}]
  %s5 = inlined_call_operand.hbm [shape: f32[8,8,32], index: 5, kind: output, shape index: {}]
  %s6 = sld [smem:[#allocation0]]
  $region81: #{tpu_custom_call.1} parent=0
    _
  %s8 = ssub.s32 1, %s6
  %s9 = scalar_select 0, %s8, %s6
  $region1: #{tpu_custom_call.1} parent=0
    #allocation8 [shape = 'u8[65536]{0}', space=vmem, size = 0x10000, scoped, tag = 'input window, operand 0']
    #allocation9 [shape = 's32[2]{0}', space=sflag, size = 0x8, scoped, tag = 'scoped memory for tpu_custom_call.1']
    #allocation10 [shape = 's32[2]{0}', space=sflag, size = 0x8, scoped, tag = 'scoped memory for tpu_custom_call.1']
    #allocation11 [shape = 'u8[65536]{0}', space=vmem, size = 0x10000, scoped, tag = 'input window, operand 1']
    #allocation12 [shape = 's32[2]{0}', space=sflag, size = 0x8, scoped, tag = 'scoped memory for tpu_custom_call.1']
    #allocation13 [shape = 'u8[8192]{0}', space=vmem, size = 0x2000, scoped, tag = 'input window, operand 2, single buffered']
    #allocation14 [shape = 'u8[65536]{0}', space=vmem, size = 0x10000, scoped, tag = 'output window, operand 0']
    %10 = vsyncpa [#allocation9], 0
    %s11 = scalar_lea.sflag [#allocation9], 1
    %12 = vsyncpa %s11, 0
    %13 = vsyncpa [#allocation12], 0
    %s14 = scalar_lea.sflag [#allocation12], 1
    %15 = vsyncpa %s14, 0
    %16 = vsyncpa [#allocation10], 0
    %s17 = scalar_lea.sflag [#allocation10], 1
    %18 = vsyncpa %s17, 0
    loop: start=0, step=1, limit=4
    $region2: #{tpu_custom_call.1} parent=1 // loop_pre_header
      _
    $region3: #{tpu_custom_call.1} parent=1 // loop_header
      %s20 = sphi 0, %s24
      %p21 = scmp.ge.s32.totalorder %s20, 4
      %s27 = sphi 0, %s39
      %s28 = sphi 0, %s35
      %s29 = sphi 0, %s27
      %s30 = sphi 0, %s28
      %s31 = sphi 0, %s29
      %s32 = sphi 0, %s30
      %s46 = sphi 0, %s48
      %s49 = sphi 0, %s46
      %s50 = sphi 0, %s49
      %s66 = sphi 0, %s50
      %s76 = sphi 0, %s78
      %s79 = sphi 0, %s76
      %s80 = sphi 0, %s79
      %s96 = sphi 0, %s80
      %s100 = sphi 0, %s100
      %s102 = sphi 0, %s100
      %s103 = sphi 0, %s102
      %s117 = sphi 0, %s103
      %s121 = sphi 0, %s121
      %s123 = sphi 0, %s121
      %s124 = sphi 0, %s123
      %s138 = sphi 0, %s124
      %s142 = sphi 0, %s142
      %s144 = sphi 0, %s142
      %s145 = sphi 0, %s144
      %s159 = sphi 0, %s145
      %s167 = sphi 0, %s169
      %s170 = sphi 0, %s167
      %s171 = sphi 0, %s170
      %s187 = sphi 0, %s171
    $region4: #{tpu_custom_call.1} parent=1 // loop_header_branch
      %23 = sbr.rel (%p21) target = $region8
    $region5: #{tpu_custom_call.1} parent=1 // loop_body
      %s25 = ssub.s32 %s20, 1
      %s26 = ssub.s32 %s20, 2
      %s33 = sadd.s32 1, %s28
      %p34 = scmp.ge.s32.totalorder %s33, 1
      %s35 = scalar_select %p34, 0, %s33
      %s36 = sadd.s32 1, %s27
      %s37 = scalar_select %p34, %s36, %s27
      %p38 = scmp.ge.s32.totalorder %s37, 2
      %s39 = scalar_select %p38, 0, %s37
      %s40 = ssub.s32 1, %s27
      %s41 = smul.u32 %s28, %s40
      %s42 = ssub.s32 1, %s39
      %s43 = smul.u32 %s35, %s42
      %s44 = ssub.s32 %s41, %s43
      %p45 = scmp.eq.s32.totalorder %s44, 0
      %s47 = sadd.s32 %s46, 1
      %s48 = scalar_select %p45, %s46, %s47
      %p51 = pneg %p45
      %p52 = scmp.eq.s32.totalorder %s20, 1
      %p53 = por %p51, %p52
      %p54 = scmp.ne.s32.totalorder %s46, %s49
      %p55 = scmp.eq.s32.totalorder %s20, 0
      %p56 = por %p54, %p55
      %p57 = scmp.ne.s32.totalorder %s46, %s49
      %p58 = scmp.eq.s32.totalorder %s25, 1
      %p59 = por %p57, %p58
      %p60 = scmp.ne.s32.totalorder %s49, %s50
      %p61 = scmp.eq.s32.totalorder %s25, 0
      %p62 = por %p60, %p61
      %p63 = scmp.ne.s32.totalorder %s49, %s50
      %p64 = scmp.eq.s32.totalorder %s26, 1
      %p65 = por %p63, %p64
      %p67 = scmp.ne.s32.totalorder %s50, %s66
      %p68 = scmp.eq.s32.totalorder %s26, 0
      %p69 = por %p67, %p68
      %s70 = ssub.s32 1, %s27
      %s71 = smul.u32 %s28, %s70
      %s72 = ssub.s32 1, %s39
      %s73 = smul.u32 %s35, %s72
      %s74 = ssub.s32 %s71, %s73
      %p75 = scmp.eq.s32.totalorder %s74, 0
      %s77 = sadd.s32 %s76, 1
      %s78 = scalar_select %p75, %s76, %s77
      %p81 = pneg %p75
      %p82 = scmp.eq.s32.totalorder %s20, 1
      %p83 = por %p81, %p82
      %p84 = scmp.ne.s32.totalorder %s76, %s79
      %p85 = scmp.eq.s32.totalorder %s20, 0
      %p86 = por %p84, %p85
      %p87 = scmp.ne.s32.totalorder %s76, %s79
      %p88 = scmp.eq.s32.totalorder %s25, 1
      %p89 = por %p87, %p88
      %p90 = scmp.ne.s32.totalorder %s79, %s80
      %p91 = scmp.eq.s32.totalorder %s25, 0
      %p92 = por %p90, %p91
      %p93 = scmp.ne.s32.totalorder %s79, %s80
      %p94 = scmp.eq.s32.totalorder %s26, 1
      %p95 = por %p93, %p94
      %p97 = scmp.ne.s32.totalorder %s80, %s96
      %p98 = scmp.eq.s32.totalorder %s26, 0
      %p99 = por %p97, %p98
      %s101 = sadd.s32 %s100, 1
      %p104 = scmp.eq.s32.totalorder %s20, 1
      %p105 = scmp.ne.s32.totalorder %s100, %s102
      %p106 = scmp.eq.s32.totalorder %s20, 0
      %p107 = por %p105, %p106
      %p108 = scmp.ne.s32.totalorder %s100, %s102
      %p109 = scmp.eq.s32.totalorder %s25, 1
      %p110 = por %p108, %p109
      %p111 = scmp.ne.s32.totalorder %s102, %s103
      %p112 = scmp.eq.s32.totalorder %s25, 0
      %p113 = por %p111, %p112
      %p114 = scmp.ne.s32.totalorder %s102, %s103
      %p115 = scmp.eq.s32.totalorder %s26, 1
      %p116 = por %p114, %p115
      %p118 = scmp.ne.s32.totalorder %s103, %s117
      %p119 = scmp.eq.s32.totalorder %s26, 0
      %p120 = por %p118, %p119
      %s122 = sadd.s32 %s121, 1
      %p125 = scmp.eq.s32.totalorder %s20, 1
      %p126 = scmp.ne.s32.totalorder %s121, %s123
      %p127 = scmp.eq.s32.totalorder %s20, 0
      %p128 = por %p126, %p127
      %p129 = scmp.ne.s32.totalorder %s121, %s123
      %p130 = scmp.eq.s32.totalorder %s25, 1
      %p131 = por %p129, %p130
      %p132 = scmp.ne.s32.totalorder %s123, %s124
      %p133 = scmp.eq.s32.totalorder %s25, 0
      %p134 = por %p132, %p133
      %p135 = scmp.ne.s32.totalorder %s123, %s124
      %p136 = scmp.eq.s32.totalorder %s26, 1
      %p137 = por %p135, %p136
      %p139 = scmp.ne.s32.totalorder %s124, %s138
      %p140 = scmp.eq.s32.totalorder %s26, 0
      %p141 = por %p139, %p140
      %s143 = sadd.s32 %s142, 1
      %p146 = scmp.eq.s32.totalorder %s20, 1
      %p147 = scmp.ne.s32.totalorder %s142, %s144
      %p148 = scmp.eq.s32.totalorder %s20, 0
      %p149 = por %p147, %p148
      %p150 = scmp.ne.s32.totalorder %s142, %s144
      %p151 = scmp.eq.s32.totalorder %s25, 1
      %p152 = por %p150, %p151
      %p153 = scmp.ne.s32.totalorder %s144, %s145
      %p154 = scmp.eq.s32.totalorder %s25, 0
      %p155 = por %p153, %p154
      %p156 = scmp.ne.s32.totalorder %s144, %s145
      %p157 = scmp.eq.s32.totalorder %s26, 1
      %p158 = por %p156, %p157
      %p160 = scmp.ne.s32.totalorder %s145, %s159
      %p161 = scmp.eq.s32.totalorder %s26, 0
      %p162 = por %p160, %p161
      %s163 = smul.u32 %s28, %s27
      %s164 = smul.u32 %s35, %s39
      %s165 = ssub.s32 %s163, %s164
      %p166 = scmp.eq.s32.totalorder %s165, 0
      %s168 = sadd.s32 %s167, 1
      %s169 = scalar_select %p166, %s167, %s168
      %p172 = pneg %p166
      %p173 = scmp.eq.s32.totalorder %s20, 1
      %p174 = por %p172, %p173
      %p175 = scmp.ne.s32.totalorder %s167, %s170
      %p176 = scmp.eq.s32.totalorder %s20, 0
      %p177 = por %p175, %p176
      %p178 = scmp.ne.s32.totalorder %s167, %s170
      %p179 = scmp.eq.s32.totalorder %s25, 1
      %p180 = por %p178, %p179
      %p181 = scmp.ne.s32.totalorder %s170, %s171
      %p182 = scmp.eq.s32.totalorder %s25, 0
      %p183 = por %p181, %p182
      %p184 = scmp.ne.s32.totalorder %s170, %s171
      %p185 = scmp.eq.s32.totalorder %s26, 1
      %p186 = por %p184, %p185
      %p188 = scmp.ne.s32.totalorder %s171, %s187
      %p189 = scmp.eq.s32.totalorder %s26, 0
      %p190 = por %p188, %p189
      %p191 = scmp.le.s32.totalorder 1, %s20
      %p192 = scmp.lt.s32.totalorder %s20, 3
      %p193 = pnand %p191, %p192
      %p194 = pneg %p193
      // Predicated region
      $region9: #{tpu_custom_call.1} parent=5 // pred_check
        _
      $region10: #{tpu_custom_call.1} parent=5 // pred_check_branch
        %196 = sbr.rel (%p193) target = $region12
      $region11: #{tpu_custom_call.1} parent=5 // pred_region
        %s197 = ssub.s32 %s20, 1
        // Predicated region
        $region13: #{tpu_custom_call.1} parent=11 // pred_check
          %p198 = pneg %p113
        $region14: #{tpu_custom_call.1} parent=11 // pred_check_branch
          %200 = sbr.rel (%p198) target = $region16
        $region15: #{tpu_custom_call.1} parent=11 // pred_region
          %202 = vsyncadd [#allocation12], 0
          %s203 = sshll.u32 %s2, 4
          %s204 = int_to_ptr.hbm [resolvable:$true] %s203
          %s205 = sshll.u32 [#allocation13], 4
          %s206 = int_to_ptr.vmem [resolvable:$true] %s205
          %211 = dma.hbm_to_vmem [thread:$0]  %s204, 256, %s206, [#allocation12], 64, 64, 4
        $region16: #{tpu_custom_call.1} parent=11 // pred_fallthru
          _
        // Predicated region
        $region17: #{tpu_custom_call.1} parent=11 // pred_check
          %p212 = pneg %p134
        $region18: #{tpu_custom_call.1} parent=11 // pred_check_branch
          %214 = sbr.rel (%p212) target = $region20
        $region19: #{tpu_custom_call.1} parent=11 // pred_region
          _
        $region20: #{tpu_custom_call.1} parent=11 // pred_fallthru
          _
        // Predicated region
        $region21: #{tpu_custom_call.1} parent=11 // pred_check
          %p215 = pneg %p155
        $region22: #{tpu_custom_call.1} parent=11 // pred_check_branch
          %217 = sbr.rel (%p215) target = $region24
        $region23: #{tpu_custom_call.1} parent=11 // pred_region
          _
        $region24: #{tpu_custom_call.1} parent=11 // pred_fallthru
          _
      $region12: #{tpu_custom_call.1} parent=5 // pred_fallthru
        _
      %p218 = scmp.lt.s32.totalorder %s20, 2
      // Predicated region
      $region25: #{tpu_custom_call.1} parent=5 // pred_check
        %p219 = pneg %p218
      $region26: #{tpu_custom_call.1} parent=5 // pred_check_branch
        %221 = sbr.rel (%p219) target = $region28
      $region27: #{tpu_custom_call.1} parent=5 // pred_region
        // Predicated region
        $region29: #{tpu_custom_call.1} parent=27 // pred_check
          %p222 = pneg %p56
        $region30: #{tpu_custom_call.1} parent=27 // pred_check_branch
          %224 = sbr.rel (%p222) target = $region32
        $region31: #{tpu_custom_call.1} parent=27 // pred_region
          %s225 = sand.u32 %s46, 1
          %s226 = scalar_lea.sflag [#allocation9], %s225
          %s227 = sand.u32 %s46, 1
          %s228 = smul.addr %s227, 64
          %s229 = scalar_lea.vmem [#allocation8], %s228
          %s230 = ssub.s32 1, %s27
          %s231 = smul.u32 %s28, %s230
          %s232 = smul.u32 8, %s231
          %234 = vsyncadd %s226, 0
          %s235 = smul.addr %s232, 8
          %s236 = scalar_lea.hbm %s0, %s235
          %s237 = sshll.u32 %s236, 4
          %s238 = int_to_ptr.hbm [resolvable:$true] %s237
          %s239 = sshll.u32 %s229, 4
          %s240 = int_to_ptr.vmem [resolvable:$true] %s239
          %245 = dma.hbm_to_vmem [thread:$0]  %s238, 1024, %s240, %s226, 128, 128, 8
        $region32: #{tpu_custom_call.1} parent=27 // pred_fallthru
          _
        // Predicated region
        $region33: #{tpu_custom_call.1} parent=27 // pred_check
          %p246 = pneg %p86
        $region34: #{tpu_custom_call.1} parent=27 // pred_check_branch
          %248 = sbr.rel (%p246) target = $region36
        $region35: #{tpu_custom_call.1} parent=27 // pred_region
          %s249 = sand.u32 %s20, 1
          %s250 = scalar_lea.sflag [#allocation12], %s249
          %s251 = sand.u32 %s76, 1
          %s252 = smul.addr %s251, 64
          %s253 = scalar_lea.vmem [#allocation11], %s252
          %s254 = ssub.s32 1, %s27
          %s255 = smul.u32 %s28, %s254
          %s256 = smul.u32 8, %s255
          %258 = vsyncadd %s250, 0
          %s259 = smul.addr %s256, 8
          %s260 = scalar_lea.hbm %s1, %s259
          %s261 = sshll.u32 %s260, 4
          %s262 = int_to_ptr.hbm [resolvable:$true] %s261
          %s263 = sshll.u32 %s253, 4
          %s264 = int_to_ptr.vmem [resolvable:$true] %s263
          %269 = dma.hbm_to_vmem [thread:$0]  %s262, 1024, %s264, %s250, 128, 128, 8
        $region36: #{tpu_custom_call.1} parent=27 // pred_fallthru
          _
      $region28: #{tpu_custom_call.1} parent=5 // pred_fallthru
        _
      %p270 = scmp.le.s32.totalorder 1, %s20
      %p271 = scmp.lt.s32.totalorder %s20, 3
      %p272 = pnand %p270, %p271
      %p273 = pneg %p272
      // Predicated region
      $region37: #{tpu_custom_call.1} parent=5 // pred_check
        _
      $region38: #{tpu_custom_call.1} parent=5 // pred_check_branch
        %275 = sbr.rel (%p272) target = $region40
      $region39: #{tpu_custom_call.1} parent=5 // pred_region
        %s276 = ssub.s32 %s20, 1
        %s277 = sand.u32 %s49, 1
        %s278 = scalar_lea.sflag [#allocation9], %s277
        %s279 = sand.u32 %s49, 1
        %s280 = smul.addr %s279, 64
        %s281 = scalar_lea.vmem [#allocation8], %s280
        // Predicated region
        $region41: #{tpu_custom_call.1} parent=39 // pred_check
          %p282 = pneg %p62
        $region42: #{tpu_custom_call.1} parent=39 // pred_check_branch
          %284 = sbr.rel (%p282) target = $region44
        $region43: #{tpu_custom_call.1} parent=39 // pred_region
          %286 = dma.done %s278, 1024
        $region44: #{tpu_custom_call.1} parent=39 // pred_fallthru
          _
        %s287 = sand.u32 %s25, 1
        %s288 = scalar_lea.sflag [#allocation12], %s287
        %s289 = sand.u32 %s79, 1
        %s290 = smul.addr %s289, 64
        %s291 = scalar_lea.vmem [#allocation11], %s290
        // Predicated region
        $region45: #{tpu_custom_call.1} parent=39 // pred_check
          %p292 = pneg %p92
        $region46: #{tpu_custom_call.1} parent=39 // pred_check_branch
          %294 = sbr.rel (%p292) target = $region48
        $region47: #{tpu_custom_call.1} parent=39 // pred_region
          %296 = dma.done %s288, 1024
        $region48: #{tpu_custom_call.1} parent=39 // pred_fallthru
          _
        // Predicated region
        $region49: #{tpu_custom_call.1} parent=39 // pred_check
          %p297 = pneg %p113
        $region50: #{tpu_custom_call.1} parent=39 // pred_check_branch
          %299 = sbr.rel (%p297) target = $region52
        $region51: #{tpu_custom_call.1} parent=39 // pred_region
          %301 = dma.done [#allocation12], 256
        $region52: #{tpu_custom_call.1} parent=39 // pred_fallthru
          _
        %s302 = sand.u32 %s49, 1
        %s303 = scalar_lea.sflag [#allocation9], %s302
        %s304 = sand.u32 %s49, 1
        %s305 = smul.addr %s304, 64
        %s306 = scalar_lea.vmem [#allocation8], %s305
        %p307 = pneg %p62
        %p308 = pneg %p59
        %s309 = sand.u32 %s25, 1
        %s310 = scalar_lea.sflag [#allocation12], %s309
        %s311 = sand.u32 %s79, 1
        %s312 = smul.addr %s311, 64
        %s313 = scalar_lea.vmem [#allocation11], %s312
        %p314 = pneg %p92
        %p315 = pneg %p89
        %p316 = pneg %p113
        %p317 = pneg %p110
        %p318 = pneg %p134
        %p319 = pneg %p131
        %p320 = pneg %p155
        %p321 = pneg %p152
        %p322 = pneg %p183
        %p323 = pneg %p180
        %s324 = sand.u32 %s170, 1
        %s325 = scalar_lea.sflag [#allocation10], %s324
        %s326 = sand.u32 %s170, 1
        %s327 = smul.addr %s326, 64
        %s328 = scalar_lea.vmem [#allocation14], %s327
        %s329 = ssub.s32 1, %s29
        %s330 = smul.u32 %s30, %s329
        %s331 = smul.u32 8, %s330
        %s332 = ssub.s32 1, %s29
        %s333 = smul.u32 %s30, %s332
        %s334 = smul.u32 8, %s333
        %s335 = smul.u32 %s30, %s29
        %s336 = smul.u32 8, %s335
        %s338 = smul.u32 %s30, 8
        %p339 = scmp.eq.s32.totalorder %s29, 0
        // Predicated region
        $region53: #{tpu_custom_call.1} parent=39 // pred_check
          %p340 = pneg %p339
        $region54: #{tpu_custom_call.1} parent=39 // pred_check_branch
          %342 = sbr.rel (%p340) target = $region56
        $region55: #{tpu_custom_call.1} parent=39 // pred_region
          %p343 = scmp.eq.s32.totalorder %s30, 0
          // Predicated region
          $region57: #{tpu_custom_call.1} parent=55 // pred_check
            %p344 = pneg %p343
          $region58: #{tpu_custom_call.1} parent=55 // pred_check_branch
            %346 = sbr.rel (%p344) target = $region60
          $region59: #{tpu_custom_call.1} parent=55 // pred_region
            %347 = vst [vmem:[#allocation4] sm:$0x1] 0.0
            %348 = vst [vmem:[#allocation5] sm:$0x1] 0.0
            %vm349 = vcmask 523264
            %350 = vst.msk [vmem:[#allocation3] sm:$0xff] %vm349, 0.0
            %351 = vst.msk [vmem:[#allocation3 + $0x8] sm:$0xff] %vm349, 0.0
            %352 = vst.msk [vmem:[#allocation3 + $0x10] sm:$0xff] %vm349, 0.0
            %353 = vst.msk [vmem:[#allocation3 + $0x18] sm:$0xff] %vm349, 0.0
            %354 = vst.msk [vmem:[#allocation3 + $0x20] sm:$0xff] %vm349, 0.0
            %355 = vst.msk [vmem:[#allocation3 + $0x28] sm:$0xff] %vm349, 0.0
            %356 = vst.msk [vmem:[#allocation3 + $0x30] sm:$0xff] %vm349, 0.0
            %357 = vst.msk [vmem:[#allocation3 + $0x38] sm:$0xff] %vm349, 0.0
          $region60: #{tpu_custom_call.1} parent=55 // pred_fallthru
            _
          %v358 = vld [vmem:[%s281] sm:$0xff]
          %v359 = vld [vmem:[%s281 + $0x8] sm:$0xff]
          %v360 = vld [vmem:[%s281 + $0x10] sm:$0xff]
          %v361 = vld [vmem:[%s281 + $0x18] sm:$0xff]
          %v362 = vld [vmem:[%s281 + $0x20] sm:$0xff]
          %v363 = vld [vmem:[%s281 + $0x28] sm:$0xff]
          %v364 = vld [vmem:[%s281 + $0x30] sm:$0xff]
          %v365 = vld [vmem:[%s281 + $0x38] sm:$0xff]
          %v366 = vpack.c.bf16 %v359, %v358
          %v367 = vpack.c.bf16 %v361, %v360
          %v368 = vpack.c.bf16 %v363, %v362
          %v369 = vpack.c.bf16 %v365, %v364
          %v370 = vld [vmem:[%s291] sm:$0xff]
          %vm371 = vcmask 64512
          %372 = vst.msk [vmem:[#allocation3] sm:$0xff] %vm371, %v370
          %s373 = scalar_lea.vmem %s291, 8 [#allocation11]
          %v374 = vld [vmem:[%s373] sm:$0xff]
          %376 = vrot.lane.b32.xlu0 %v374, 8
          %v377 = vpop.permute.xlu0 %376
          %vm379 = vcmask 130112
          %380 = vst.msk [vmem:[#allocation3 + $0x8] sm:$0xff] %vm379, %v377
          %s381 = scalar_lea.vmem %s291, 16 [#allocation11]
          %v382 = vld [vmem:[%s381] sm:$0xff]
          %384 = vrot.lane.b32.xlu0 %v382, 16
          %v385 = vpop.permute.xlu0 %384
          %vm387 = vcmask 195712
          %388 = vst.msk [vmem:[#allocation3 + $0x10] sm:$0xff] %vm387, %v385
          %s389 = scalar_lea.vmem %s291, 24 [#allocation11]
          %v390 = vld [vmem:[%s389] sm:$0xff]
          %392 = vrot.lane.b32.xlu0 %v390, 24
          %v393 = vpop.permute.xlu0 %392
          %vm395 = vcmask 261312
          %396 = vst.msk [vmem:[#allocation3 + $0x18] sm:$0xff] %vm395, %v393
          %s397 = scalar_lea.vmem %s291, 32 [#allocation11]
          %v398 = vld [vmem:[%s397] sm:$0xff]
          %400 = vrot.lane.b32.xlu0 %v398, 32
          %v401 = vpop.permute.xlu0 %400
          %vm403 = vcmask 326912
          %404 = vst.msk [vmem:[#allocation3 + $0x20] sm:$0xff] %vm403, %v401
          %s405 = scalar_lea.vmem %s291, 40 [#allocation11]
          %v406 = vld [vmem:[%s405] sm:$0xff]
          %408 = vrot.lane.b32.xlu0 %v406, 40
          %v409 = vpop.permute.xlu0 %408
          %vm411 = vcmask 392512
          %412 = vst.msk [vmem:[#allocation3 + $0x28] sm:$0xff] %vm411, %v409
          %s413 = scalar_lea.vmem %s291, 48 [#allocation11]
          %v414 = vld [vmem:[%s413] sm:$0xff]
          %416 = vrot.lane.b32.xlu0 %v414, 48
          %v417 = vpop.permute.xlu0 %416
          %vm419 = vcmask 458112
          %420 = vst.msk [vmem:[#allocation3 + $0x30] sm:$0xff] %vm419, %v417
          %s421 = scalar_lea.vmem %s291, 56 [#allocation11]
          %v422 = vld [vmem:[%s421] sm:$0xff]
          %424 = vrot.lane.b32.xlu0 %v422, 56
          %v425 = vpop.permute.xlu0 %424
          %vm427 = vcmask 523712
          %428 = vst.msk [vmem:[#allocation3 + $0x38] sm:$0xff] %vm427, %v425
          %v429 = vld [vmem:[#allocation3] sm:$0xff]
          %v430 = vld [vmem:[#allocation3 + $0x8] sm:$0xff]
          %v431 = vld [vmem:[#allocation3 + $0x10] sm:$0xff]
          %v432 = vld [vmem:[#allocation3 + $0x18] sm:$0xff]
          %v433 = vld [vmem:[#allocation3 + $0x20] sm:$0xff]
          %v434 = vld [vmem:[#allocation3 + $0x28] sm:$0xff]
          %v435 = vld [vmem:[#allocation3 + $0x30] sm:$0xff]
          %v436 = vld [vmem:[#allocation3 + $0x38] sm:$0xff]
          %v437 = vpack.c.bf16 %v430, %v429
          %v438 = vpack.c.bf16 %v432, %v431
          %v439 = vpack.c.bf16 %v434, %v433
          %v440 = vpack.c.bf16 %v436, %v435
          %v441 = vld [vmem:[#allocation13] sm:$0xf]
          %v442 = vld [vmem:[#allocation13 + $0x4] sm:$0xf]
          %v443 = vld [vmem:[#allocation13 + $0x8] sm:$0xf]
          %v444 = vld [vmem:[#allocation13 + $0xc] sm:$0xf]
          %v449 = vunpack.c.l.b16 %v441
          %v450 = vunpack.c.l.b16 %v442
          %v451 = vunpack.c.l.b16 %v443
          %v452 = vunpack.c.l.b16 %v444
          %v453 = vpack.c.b16 %v450, %v449
          %v454 = vpack.c.b16 %v452, %v451
          %vm457 = vcmask 261120
          %v459 = vsel %vm457, %v366, 0
          %v462 = vsel %vm457, %v367, 0
          %v465 = vsel %vm457, %v368, 0
          %v468 = vsel %vm457, %v369, 0
          %470 = vmatpush.bf16.msra.mxu0 0
          %471 = vmatpush.bf16.msra.mxu0 0
          %472 = vmatpush.bf16.msra.mxu0 0
          %473 = vmatpush.bf16.msra.mxu0 0
          %474 = vmatpush.bf16.msra.mxu0 0
          %475 = vmatpush.bf16.msra.mxu0 0
          %476 = vmatpush.bf16.msra.mxu0 %v454
          %477 = vmatpush.bf16.msra.mxu0 %v453
          %478 = vmatmul.bf16.gmra.mxu0 %v459
          %v479 = vpop.f32.mrf.mxu0
          %v480 = vadd.f32 0.0, %v479
          %v481 = vpop.f32.mrf.mxu0
          %v482 = vadd.f32 0.0, %v481
          %483 = vmatmul.bf16.gmra.mxu0 %v462
          %v484 = vpop.f32.mrf.mxu0
          %v485 = vadd.f32 0.0, %v484
          %v486 = vpop.f32.mrf.mxu0
          %v487 = vadd.f32 0.0, %v486
          %488 = vmatmul.bf16.gmra.mxu0 %v465
          %v489 = vpop.f32.mrf.mxu0
          %v490 = vadd.f32 0.0, %v489
          %v491 = vpop.f32.mrf.mxu0
          %v492 = vadd.f32 0.0, %v491
          %493 = vmatmul.bf16.gmra.mxu0 %v468
          %v494 = vpop.f32.mrf.mxu0
          %v495 = vadd.f32 0.0, %v494
          %v496 = vpop.f32.mrf.mxu0
          %v497 = vadd.f32 0.0, %v496
          %498 = vdwg.mxu0
          %v499 = vpack.c.bf16 %v482, %v480
          %v500 = vpack.c.bf16 %v487, %v485
          %v501 = vpack.c.bf16 %v492, %v490
          %v502 = vpack.c.bf16 %v497, %v495
          %vm503 = vcmask 523264
          %v505 = vsel %vm503, %v437, 0
          %v508 = vsel %vm503, %v438, 0
          %v511 = vsel %vm503, %v439, 0
          %v514 = vsel %vm503, %v440, 0
          %516 = vmatpush.bf16.msra.mxu0 0
          %517 = vmatpush.bf16.msra.mxu0 0
          %518 = vmatpush.bf16.msra.mxu0 0
          %519 = vmatpush.bf16.msra.mxu0 0
          %520 = vmatpush.bf16.msra.mxu0 %v502
          %521 = vmatpush.bf16.msra.mxu0 %v501
          %522 = vmatpush.bf16.msra.mxu0 %v500
          %523 = vmatpush.bf16.msra.mxu0 %v499
          %524 = vmatmul.bf16.gmra.mxu0 %v505
          %v525 = vpop.f32.mrf.mxu0
          %v526 = vadd.f32 0.0, %v525
          %v527 = vpop.f32.mrf.mxu0
          %v528 = vadd.f32 0.0, %v527
          %529 = vmatmul.bf16.gmra.mxu0 %v508
          %v530 = vpop.f32.mrf.mxu0
          %v531 = vadd.f32 0.0, %v530
          %v532 = vpop.f32.mrf.mxu0
          %v533 = vadd.f32 0.0, %v532
          %534 = vmatmul.bf16.gmra.mxu0 %v511
          %v535 = vpop.f32.mrf.mxu0
          %v536 = vadd.f32 0.0, %v535
          %v537 = vpop.f32.mrf.mxu0
          %v538 = vadd.f32 0.0, %v537
          %539 = vmatmul.bf16.gmra.mxu0 %v514
          %v540 = vpop.f32.mrf.mxu0
          %v541 = vadd.f32 0.0, %v540
          %v542 = vpop.f32.mrf.mxu0
          %v543 = vadd.f32 0.0, %v542
          %544 = vdwg.mxu0
          %s545 = smul.u32 %s338, 8
          %s546 = scalar_lea.vmem [#allocation2], %s545
          %547 = vst [vmem:[%s546] sm:$0xff] %v526
          %548 = vst [vmem:[%s546 + $0x8] sm:$0xff] %v528
          %549 = vst [vmem:[%s546 + $0x10] sm:$0xff] %v531
          %550 = vst [vmem:[%s546 + $0x18] sm:$0xff] %v533
          %551 = vst [vmem:[%s546 + $0x20] sm:$0xff] %v536
          %552 = vst [vmem:[%s546 + $0x28] sm:$0xff] %v538
          %553 = vst [vmem:[%s546 + $0x30] sm:$0xff] %v541
          %554 = vst [vmem:[%s546 + $0x38] sm:$0xff] %v543
          %v555 = vld [vmem:[#allocation4] sm:$0x1]
          %v556 = vadd.f32 %v526, %v528
          %v557 = vadd.f32 %v556, %v531
          %v558 = vadd.f32 %v557, %v533
          %v559 = vadd.f32 %v558, %v536
          %v560 = vadd.f32 %v559, %v538
          %v561 = vadd.f32 %v560, %v541
          %v562 = vadd.f32 %v561, %v543
          %v563 = vrot.slane %v562, 4
          %v564 = vadd.f32 %v562, %v563
          %v565 = vrot.slane %v564, 2
          %v566 = vadd.f32 %v564, %v565
          %v567 = vrot.slane %v566, 1
          %v568 = vadd.f32 %v566, %v567
          %v569 = vadd.f32 %v555, %v568
          %570 = vst [vmem:[#allocation4] sm:$0x1] %v569
          %v571 = vld [vmem:[#allocation5] sm:$0x1]
          %v572 = vmul.f32 %v526, %v526
          %v573 = vmul.f32 %v528, %v528
          %v574 = vmul.f32 %v531, %v531
          %v575 = vmul.f32 %v533, %v533
          %v576 = vmul.f32 %v536, %v536
          %v577 = vmul.f32 %v538, %v538
          %v578 = vmul.f32 %v541, %v541
          %v579 = vmul.f32 %v543, %v543
          %v580 = vadd.f32 %v572, %v573
          %v581 = vadd.f32 %v580, %v574
          %v582 = vadd.f32 %v581, %v575
          %v583 = vadd.f32 %v582, %v576
          %v584 = vadd.f32 %v583, %v577
          %v585 = vadd.f32 %v584, %v578
          %v586 = vadd.f32 %v585, %v579
          %v587 = vrot.slane %v586, 4
          %v588 = vadd.f32 %v586, %v587
          %v589 = vrot.slane %v588, 2
          %v590 = vadd.f32 %v588, %v589
          %v591 = vrot.slane %v590, 1
          %v592 = vadd.f32 %v590, %v591
          %v593 = vadd.f32 %v571, %v592
          %594 = vst [vmem:[#allocation5] sm:$0x1] %v593
        $region56: #{tpu_custom_call.1} parent=39 // pred_fallthru
          _
        %p595 = scmp.eq.s32.totalorder %s29, 1
        // Predicated region
        $region61: #{tpu_custom_call.1} parent=39 // pred_check
          %p596 = pneg %p595
        $region62: #{tpu_custom_call.1} parent=39 // pred_check_branch
          %598 = sbr.rel (%p596) target = $region64
        $region63: #{tpu_custom_call.1} parent=39 // pred_region
          %p599 = scmp.eq.s32.totalorder %s30, 0
          // Predicated region
          $region65: #{tpu_custom_call.1} parent=63 // pred_check
            %p600 = pneg %p599
          $region66: #{tpu_custom_call.1} parent=63 // pred_check_branch
            %602 = sbr.rel (%p600) target = $region68
          $region67: #{tpu_custom_call.1} parent=63 // pred_region
            %v603 = vld [vmem:[#allocation4] sm:$0x1]
            %v604 = vmul.f32 %v603, 0.015625
            %v605 = vld [vmem:[#allocation5] sm:$0x1]
            %v606 = vmul.f32 %v605, 0.015625
            %v607 = vmul.f32 %v604, %v604
            %v608 = vsub.f32 %v606, %v607
            %v609 = vmax.f32 %v608, 0.0
            %v610 = vadd.f32 %v609, 1e-05
            %v611 = vrsqrt.pop %v610
            %v612 = vmul.f32 %v611, %v610
            %v613 = vmul.f32 %v612, %v611
            %v614 = vmul.f32 0.5, %v613
            %v615 = vsub.f32 1.5, %v614
            %v616 = vmul.f32 %v611, %v615
            %vm617 = vweird.f32 %v610
            %vm618 = vweird.f32 %v611
            %vm619 = vmor %vm617, %vm618
            %v620 = vsel %vm619, %v611, %v616
            %v621 = vld [vmem:[%s3] sm:$0x1]
            %v622 = vmul.f32 %v621, %v620
            %623 = vst [vmem:[#allocation6] sm:$0x1] %v622
            %v624 = vld [vmem:[%s4] sm:$0x1]
            %v625 = vmul.f32 %v604, %v622
            %v626 = vsub.f32 %v624, %v625
            %627 = vst [vmem:[#allocation7] sm:$0x1] %v626
          $region68: #{tpu_custom_call.1} parent=63 // pred_fallthru
            _
          %s628 = smul.u32 %s338, 8
          %s629 = scalar_lea.vmem [#allocation2], %s628
          %v630 = vld [vmem:[%s629] sm:$0xff]
          %v631 = vld [vmem:[%s629 + $0x8] sm:$0xff]
          %v632 = vld [vmem:[%s629 + $0x10] sm:$0xff]
          %v633 = vld [vmem:[%s629 + $0x18] sm:$0xff]
          %v634 = vld [vmem:[%s629 + $0x20] sm:$0xff]
          %v635 = vld [vmem:[%s629 + $0x28] sm:$0xff]
          %v636 = vld [vmem:[%s629 + $0x30] sm:$0xff]
          %v637 = vld [vmem:[%s629 + $0x38] sm:$0xff]
          %v638 = vld [vmem:[#allocation6] sm:$0x1]
          %v640 = vperm.slane %v638, 0
          %v642 = vmul.f32 %v630, %v640
          %v643 = vmul.f32 %v631, %v640
          %v644 = vmul.f32 %v632, %v640
          %v645 = vmul.f32 %v633, %v640
          %v646 = vmul.f32 %v634, %v640
          %v647 = vmul.f32 %v635, %v640
          %v648 = vmul.f32 %v636, %v640
          %v649 = vmul.f32 %v637, %v640
          %v650 = vld [vmem:[#allocation7] sm:$0x1]
          %v652 = vperm.slane %v650, 0
          %v654 = vadd.f32 %v642, %v652
          %v655 = vadd.f32 %v643, %v652
          %v656 = vadd.f32 %v644, %v652
          %v657 = vadd.f32 %v645, %v652
          %v658 = vadd.f32 %v646, %v652
          %v659 = vadd.f32 %v647, %v652
          %v660 = vadd.f32 %v648, %v652
          %v661 = vadd.f32 %v649, %v652
          %vm662 = vcmp.ge.f32.partialorder %v654, 0.0
          %vm663 = vcmp.ge.f32.partialorder %v655, 0.0
          %vm664 = vcmp.ge.f32.partialorder %v656, 0.0
          %vm665 = vcmp.ge.f32.partialorder %v657, 0.0
          %vm666 = vcmp.ge.f32.partialorder %v658, 0.0
          %vm667 = vcmp.ge.f32.partialorder %v659, 0.0
          %vm668 = vcmp.ge.f32.partialorder %v660, 0.0
          %vm669 = vcmp.ge.f32.partialorder %v661, 0.0
          %v670 = vmul.f32 %v654, 0.01
          %v671 = vmul.f32 %v655, 0.01
          %v672 = vmul.f32 %v656, 0.01
          %v673 = vmul.f32 %v657, 0.01
          %v674 = vmul.f32 %v658, 0.01
          %v675 = vmul.f32 %v659, 0.01
          %v676 = vmul.f32 %v660, 0.01
          %v677 = vmul.f32 %v661, 0.01
          %v678 = vsel %vm662, %v654, %v670
          %v679 = vsel %vm663, %v655, %v671
          %v680 = vsel %vm664, %v656, %v672
          %v681 = vsel %vm665, %v657, %v673
          %v682 = vsel %vm666, %v658, %v674
          %v683 = vsel %vm667, %v659, %v675
          %v684 = vsel %vm668, %v660, %v676
          %v685 = vsel %vm669, %v661, %v677
          %vm686 = vcmask 261120
          %687 = vst.msk [vmem:[%s328] sm:$0xff] %vm686, %v678
          %688 = vst.msk [vmem:[%s328 + $0x8] sm:$0xff] %vm686, %v679
          %689 = vst.msk [vmem:[%s328 + $0x10] sm:$0xff] %vm686, %v680
          %690 = vst.msk [vmem:[%s328 + $0x18] sm:$0xff] %vm686, %v681
          %691 = vst.msk [vmem:[%s328 + $0x20] sm:$0xff] %vm686, %v682
          %692 = vst.msk [vmem:[%s328 + $0x28] sm:$0xff] %vm686, %v683
          %693 = vst.msk [vmem:[%s328 + $0x30] sm:$0xff] %vm686, %v684
          %694 = vst.msk [vmem:[%s328 + $0x38] sm:$0xff] %vm686, %v685
        $region64: #{tpu_custom_call.1} parent=39 // pred_fallthru
          _
        %s695 = sand.u32 %s170, 1
        %s696 = scalar_lea.sflag [#allocation10], %s695
        %s697 = sand.u32 %s170, 1
        %s698 = smul.addr %s697, 64
        %s699 = scalar_lea.vmem [#allocation14], %s698
        // Predicated region
        $region69: #{tpu_custom_call.1} parent=39 // pred_check
          %p700 = pneg %p180
        $region70: #{tpu_custom_call.1} parent=39 // pred_check_branch
          %702 = sbr.rel (%p700) target = $region72
        $region71: #{tpu_custom_call.1} parent=39 // pred_region
          %s703 = smul.u32 %s30, %s29
          %s704 = smul.u32 8, %s703
          %706 = vsyncadd %s696, 0
          %s707 = smul.addr %s704, 8
          %s708 = scalar_lea.hbm %s5, %s707
          %s709 = sshll.u32 %s699, 4
          %s710 = int_to_ptr.vmem [resolvable:$true] %s709
          %s711 = sshll.u32 %s708, 4
          %s712 = int_to_ptr.hbm [resolvable:$true] %s711
          %717 = dma.vmem_to_hbm [thread:$0]  %s710, 1024, %s712, %s696, 128, 128, 8
        $region72: #{tpu_custom_call.1} parent=39 // pred_fallthru
          _
      $region40: #{tpu_custom_call.1} parent=5 // pred_fallthru
        _
      %p718 = scmp.le.s32.totalorder 2, %s20
      // Predicated region
      $region73: #{tpu_custom_call.1} parent=5 // pred_check
        %p719 = pneg %p718
      $region74: #{tpu_custom_call.1} parent=5 // pred_check_branch
        %721 = sbr.rel (%p719) target = $region76
      $region75: #{tpu_custom_call.1} parent=5 // pred_region
        %s722 = ssub.s32 %s20, 2
        // Predicated region
        $region77: #{tpu_custom_call.1} parent=75 // pred_check
          %p723 = pneg %p186
        $region78: #{tpu_custom_call.1} parent=75 // pred_check_branch
          %725 = sbr.rel (%p723) target = $region80
        $region79: #{tpu_custom_call.1} parent=75 // pred_region
          %s726 = sand.u32 %s171, 1
          %s727 = scalar_lea.sflag [#allocation10], %s726
          %s728 = sand.u32 %s171, 1
          %s729 = smul.addr %s728, 64
          %s730 = scalar_lea.vmem [#allocation14], %s729
          %732 = dma.done %s727, 1024
        $region80: #{tpu_custom_call.1} parent=75 // pred_fallthru
          _
      $region76: #{tpu_custom_call.1} parent=5 // pred_fallthru
        _
    $region6: #{tpu_custom_call.1} parent=1 // loop_footer
      %s24 = sadd.s32 1, %s20
    $region7: #{tpu_custom_call.1} parent=1 // loop_footer_branch
      %19 = sbr.rel target = $region3
    $region8: #{tpu_custom_call.1} parent=1 // loop_exit
      _
    %733 = vsyncpa [#allocation9], 1
    %s734 = scalar_lea.sflag [#allocation9], 1
    %735 = vsyncpa %s734, 1
    %736 = vsyncpa [#allocation12], 1
    %s737 = scalar_lea.sflag [#allocation12], 1
    %738 = vsyncpa %s737, 1
    %739 = vsyncpa [#allocation10], 1
    %s740 = scalar_lea.sflag [#allocation10], 1
    %741 = vsyncpa %s740, 1

</llo_original>
